<compile_context>
chip_gen: v7x
topology: tpu7x:2x2x1
jax: 0.10.0
libtpu: 0.0.40
codegen_flags: <defaults>
</compile_context>

<pallas_src>
import functools

import numpy as np
import jax
import jax.numpy as jnp
from jax import lax
from jax.experimental import pallas as pl
from jax.experimental.pallas import tpu as pltpu


# ----------------------------- Pallas kernel --------------------------------
def fused_net_kernel(x_ref, w12_ref, b12_ref, wf_ref, bf_ref, o_ref):
    """One batch tile of the whole forward pass.

    x_ref  : (bb, 64)   bf16  flattened 8x8 input images
    w12_ref: (64, 256)  bf16  conv1∘conv2 composed dense operator
                              (columns already in torch.flatten(NCHW) order)
    b12_ref: (1, 256)   f32   composed bias
    wf_ref : (256, 10)  bf16  fc1 weight, pre-transposed
    bf_ref : (1, 10)    f32   fc1 bias
    o_ref  : (bb, 10)   f32   logits
    """
    x = x_ref[...]
    # conv1 + conv2 (one fused linear op) + bias, then the ReLU that follows conv2
    y = jnp.dot(x, w12_ref[...], preferred_element_type=jnp.float32) + b12_ref[...]
    y = jnp.maximum(y, 0.0)
    # fc1 (bf16 operands, f32 accumulation)
    out = jnp.dot(y.astype(wf_ref.dtype), wf_ref[...],
                  preferred_element_type=jnp.float32) + bf_ref[...]
    o_ref[...] = out.astype(o_ref.dtype)


# ------------------------------ wrapper --------------------------------------
def _round_up(a, m):
    return ((a + m - 1) // m) * m


@functools.partial(jax.jit, static_argnames=("block_b",))
def net_forward(x, kparams, *, block_b=4096):
    """x: (N, 1, 8, 8) float32 NCHW -> logits (N, 10) float32."""
    N = x.shape[0]
    xf = x.reshape(N, 64).astype(jnp.bfloat16)   # contiguous reshape, no transpose

    if N <= 8:
        bb = N                                   # single tiny block (full-dim exemption)
    else:
        # >= 2 grid steps so both v7x TensorCores get work; bf16 sublane (16) aligned.
        bb = min(block_b, max(16, _round_up(pl.cdiv(N, 2), 16)))
    n_pad = _round_up(N, bb)
    if n_pad != N:
        xf = jnp.pad(xf, ((0, n_pad - N), (0, 0)))

    grid = (n_pad // bb,)
    bcast = lambda i: (0, 0)                     # weights/biases stay resident

    logits = pl.pallas_call(
        fused_net_kernel,
        out_shape=jax.ShapeDtypeStruct((n_pad, 10), jnp.float32),
        grid=grid,
        in_specs=[
            pl.BlockSpec((bb, 64), lambda i: (i, 0)),
            pl.BlockSpec((64, 256), bcast),
            pl.BlockSpec((1, 256), bcast),
            pl.BlockSpec((256, 10), bcast),
            pl.BlockSpec((1, 10), bcast),
        ],
        out_specs=pl.BlockSpec((bb, 10), lambda i: (i, 0)),
        compiler_params=pltpu.CompilerParams(
            dimension_semantics=("parallel",),       # batch split across TCs on v7x
            vmem_limit_bytes=32 * 1024 * 1024,       # safe on v5e/v6e/v7x; need ~6 MiB
        ),
    )(xf, kparams["w12"], kparams["b12"], kparams["wf"], kparams["bf"])

    return logits[:N] if n_pad != N else logits


# -------------------- one-time host-side parameter prep ----------------------
def prepare_params(params):
    """Fold conv1∘conv2 into ONE dense operator and pre-permute fc (runs once)."""
    w1 = np.asarray(jax.device_get(params["w1"]), np.float32)    # (8, 1, 3, 3)
    b1 = np.asarray(jax.device_get(params["b1"]), np.float32)    # (8,)
    w2 = np.asarray(jax.device_get(params["w2"]), np.float32)    # (16, 8, 3, 3)
    b2 = np.asarray(jax.device_get(params["b2"]), np.float32)    # (16,)
    fw = np.asarray(jax.device_get(params["fc_w"]), np.float32)  # (10, 256)
    fb = np.asarray(jax.device_get(params["fc_b"]), np.float32)  # (10,)

    # conv1 operator: input flat idx h*8+w ; output flat idx (i*6+j)*8 + co (NHWC).
    w1_op = np.zeros((64, 288), np.float32)
    for co in range(8):
        for i in range(6):
            for j in range(6):
                o = (i * 6 + j) * 8 + co
                for kh in range(3):
                    for kw in range(3):
                        w1_op[(i + kh) * 8 + (j + kw), o] = w1[co, 0, kh, kw]
    b1_vec = np.tile(b1, 36)                     # channel-fastest layout (matches w1_op cols)

    # conv2 operator: input idx (h*6+w)*8 + ci (== conv1 output order),
    # output idx co*16 + i*4 + j == torch.flatten(NCHW) order.
    w2_op = np.zeros((288, 256), np.float32)
    for co in range(16):
        for i in range(4):
            for j in range(4):
                o = co * 16 + i * 4 + j
                for ci in range(8):
                    for kh in range(3):
                        for kw in range(3):
                            w2_op[((i + kh) * 6 + (j + kw)) * 8 + ci, o] = w2[co, ci, kh, kw]
    b2_vec = np.repeat(b2, 16)                   # channel-slowest (matches w2_op cols)

    # Compose the two purely-linear convs (exact: ReLU comes AFTER conv2).
    w12 = w1_op @ w2_op                          # (64, 256)
    b12 = b1_vec @ w2_op + b2_vec                # (256,)

    return {
        "w12": jnp.asarray(w12, jnp.bfloat16),
        "b12": jnp.asarray(b12.reshape(1, 256), jnp.float32),
        "wf": jnp.asarray(fw.T, jnp.bfloat16),   # (256, 10)
        "bf": jnp.asarray(fb.reshape(1, 10), jnp.float32),
    }


# ------------------------------ reference ------------------------------------
def net_forward_reference(x, params):
    """Pure-JAX f32 reference using lax.conv for verification."""
    dn = ("NCHW", "OIHW", "NCHW")
    y1 = lax.conv_general_dilated(x, params["w1"], (1, 1), "VALID",
                                  dimension_numbers=dn)
    y1 = y1 + params["b1"][None, :, None, None]
    y2 = lax.conv_general_dilated(y1, params["w2"], (1, 1), "VALID",
                                  dimension_numbers=dn)
    y2 = jnp.maximum(y2 + params["b2"][None, :, None, None], 0.0)
    flat = y2.reshape(x.shape[0], -1)
    return flat @ params["fc_w"].T + params["fc_b"][None, :]


def init_params(key):
    ks = jax.random.split(key, 6)
    return {
        "w1": 0.1 * jax.random.normal(ks[0], (8, 1, 3, 3), jnp.float32),
        "b1": 0.1 * jax.random.normal(ks[1], (8,), jnp.float32),
        "w2": 0.1 * jax.random.normal(ks[2], (16, 8, 3, 3), jnp.float32),
        "b2": 0.1 * jax.random.normal(ks[3], (16,), jnp.float32),
        "fc_w": 0.1 * jax.random.normal(ks[4], (10, 256), jnp.float32),
        "fc_b": 0.1 * jax.random.normal(ks[5], (10,), jnp.float32),
    }


if __name__ == "__main__":
    key = jax.random.PRNGKey(0)
    k_x, k_p = jax.random.split(key)
    params = init_params(k_p)
    kparams = prepare_params(params)             # once, at "model load" time

    # small batch, matching the PyTorch module's expected (N, 1, 8, 8) input
    x = jax.random.normal(k_x, (2, 1, 8, 8), jnp.float32)
    logits = jax.block_until_ready(net_forward(x, kparams))
    ref = jax.block_until_ready(net_forward_reference(x, params))
    assert logits.shape == (2, 10)
    # bf16 operands (f32 accumulation) vs f32 reference -> relaxed tolerance
    assert jnp.allclose(logits, ref, atol=2e-2, rtol=2e-2), "mismatch vs reference (N=2)"

    # also exercise the batch-tiled multi-step 'parallel' grid + padding path
    x_big = jax.random.normal(k_x, (37, 1, 8, 8), jnp.float32)
    logits_big = jax.block_until_ready(net_forward(x_big, kparams, block_b=16))
    ref_big = jax.block_until_ready(net_forward_reference(x_big, params))
    assert logits_big.shape == (37, 10)
    assert jnp.allclose(logits_big, ref_big, atol=2e-2, rtol=2e-2), "mismatch vs reference (N=37)"

    print("KERNEL_OK")
</pallas_src>

<mosaic_0001>
module attributes {stable_mosaic.version = 11 : i64} {
  func.func @fused_net_kernel(%arg0: i32, %arg1: memref<2x64xbf16, #tpu.memory_space<vmem>>, %arg2: memref<64x256xbf16, #tpu.memory_space<vmem>>, %arg3: memref<1x256xf32, #tpu.memory_space<vmem>>, %arg4: memref<256x10xbf16, #tpu.memory_space<vmem>>, %arg5: memref<1x10xf32, #tpu.memory_space<vmem>>, %arg6: memref<2x10xf32, #tpu.memory_space<vmem>>) attributes {dimension_semantics = [#tpu.dimension_semantics<parallel>], iteration_bounds = array<i64: 1>, scalar_prefetch = 0 : i64, scratch_operands = 0 : i64, tpu.core_type = #tpu.core_type<tc>, window_params = [{transform_indices = @transform_0, window_bounds = array<i64: 2, 64>}, {pipeline_mode = #tpu.pipeline_mode<synchronous>, transform_indices = @transform_1, window_bounds = array<i64: 64, 256>}, {pipeline_mode = #tpu.pipeline_mode<synchronous>, transform_indices = @transform_2, window_bounds = array<i64: 1, 256>}, {pipeline_mode = #tpu.pipeline_mode<synchronous>, transform_indices = @transform_3, window_bounds = array<i64: 256, 10>}, {pipeline_mode = #tpu.pipeline_mode<synchronous>, transform_indices = @transform_4, window_bounds = array<i64: 1, 10>}, {transform_indices = @transform_5, window_bounds = array<i64: 2, 10>}]} {
    %c0 = arith.constant 0 : index
    %c0_0 = arith.constant 0 : index
    %0 = vector.load %arg1[%c0, %c0_0] : memref<2x64xbf16, #tpu.memory_space<vmem>>, vector<2x64xbf16>
    %c0_1 = arith.constant 0 : index
    %c0_2 = arith.constant 0 : index
    %1 = vector.load %arg2[%c0_1, %c0_2] : memref<64x256xbf16, #tpu.memory_space<vmem>>, vector<64x256xbf16>
    %cst = arith.constant dense<0.000000e+00> : vector<2x256xf32>
    %2 = tpu.matmul %0, %1, %cst {dimension_numbers = #tpu.dot_dimension_numbers<[1], [0], [0], [1], [0, 0, 1, 1], [], []>} : vector<2x64xbf16>, vector<64x256xbf16>, vector<2x256xf32> -> vector<2x256xf32>
    %c0_3 = arith.constant 0 : index
    %c0_4 = arith.constant 0 : index
    %3 = vector.load %arg3[%c0_3, %c0_4] : memref<1x256xf32, #tpu.memory_space<vmem>>, vector<1x256xf32>
    %4 = vector.broadcast %3 : vector<1x256xf32> to vector<2x256xf32>
    %5 = arith.addf %2, %4 : vector<2x256xf32>
    %cst_5 = arith.constant 0.000000e+00 : f32
    %6 = vector.broadcast %cst_5 : f32 to vector<2x256xf32>
    %7 = arith.maximumf %5, %6 : vector<2x256xf32>
    %8 = arith.truncf %7 : vector<2x256xf32> to vector<2x256xbf16>
    %c0_6 = arith.constant 0 : index
    %c0_7 = arith.constant 0 : index
    %9 = vector.load %arg4[%c0_6, %c0_7] : memref<256x10xbf16, #tpu.memory_space<vmem>>, vector<256x10xbf16>
    %cst_8 = arith.constant dense<0.000000e+00> : vector<2x10xf32>
    %10 = tpu.matmul %8, %9, %cst_8 {dimension_numbers = #tpu.dot_dimension_numbers<[1], [0], [0], [1], [0, 0, 1, 1], [], []>} : vector<2x256xbf16>, vector<256x10xbf16>, vector<2x10xf32> -> vector<2x10xf32>
    %c0_9 = arith.constant 0 : index
    %c0_10 = arith.constant 0 : index
    %11 = vector.load %arg5[%c0_9, %c0_10] : memref<1x10xf32, #tpu.memory_space<vmem>>, vector<1x10xf32>
    %12 = vector.broadcast %11 : vector<1x10xf32> to vector<2x10xf32>
    %13 = arith.addf %10, %12 : vector<2x10xf32>
    %c0_11 = arith.constant 0 : index
    %c0_12 = arith.constant 0 : index
    %14 = vector.load %arg6[%c0_11, %c0_12] : memref<2x10xf32, #tpu.memory_space<vmem>>, vector<2x10xf32>
    tpu.vector_store %arg6[%c0_11, %c0_12], %13 {strides = array<i32>} : memref<2x10xf32, #tpu.memory_space<vmem>>, vector<2x10xf32>,
    return
  }
  func.func @transform_0(%arg0: i32) -> (i32, i32) {
    %c0_i32 = arith.constant 0 : i32
    %c0_i32_0 = arith.constant 0 : i32
    return %arg0, %c0_i32 : i32, i32
  }
  func.func @transform_1(%arg0: i32) -> (i32, i32) {
    %c0_i32 = arith.constant 0 : i32
    %c0_i32_0 = arith.constant 0 : i32
    %c0_i32_1 = arith.constant 0 : i32
    return %c0_i32, %c0_i32_0 : i32, i32
  }
  func.func @transform_2(%arg0: i32) -> (i32, i32) {
    %c0_i32 = arith.constant 0 : i32
    %c0_i32_0 = arith.constant 0 : i32
    %c0_i32_1 = arith.constant 0 : i32
    return %c0_i32, %c0_i32_0 : i32, i32
  }
  func.func @transform_3(%arg0: i32) -> (i32, i32) {
    %c0_i32 = arith.constant 0 : i32
    %c0_i32_0 = arith.constant 0 : i32
    %c0_i32_1 = arith.constant 0 : i32
    return %c0_i32, %c0_i32_0 : i32, i32
  }
  func.func @transform_4(%arg0: i32) -> (i32, i32) {
    %c0_i32 = arith.constant 0 : i32
    %c0_i32_0 = arith.constant 0 : i32
    %c0_i32_1 = arith.constant 0 : i32
    return %c0_i32, %c0_i32_0 : i32, i32
  }
  func.func @transform_5(%arg0: i32) -> (i32, i32) {
    %c0_i32 = arith.constant 0 : i32
    %c0_i32_0 = arith.constant 0 : i32
    return %arg0, %c0_i32 : i32, i32
  }
}

</mosaic_0001>

<llo_original>
// kernel: net_forward.1
$region0: #{net_forward.1}
  #allocation0 [shape = 'u32[]', space=smem, size = 0x4, offset = 0x4, fixed_abs, tag = 'smem constant byte address 0x4 - core index']
  #allocation1 [shape = 'u32[144,128]{1,0:T(1,128)}', space=vmem, size = 0x12000, scoped, tag = 'internal scratch']
  %s0 = inlined_call_operand.vmem [shape: bf16[2,64], index: 0, kind: input, shape index: {}]
  %s1 = inlined_call_operand.vmem [shape: bf16[64,256], index: 1, kind: input, shape index: {}]
  %s2 = inlined_call_operand.vmem [shape: f32[1,256], index: 2, kind: input, shape index: {}]
  %s3 = inlined_call_operand.vmem [shape: bf16[256,10], index: 3, kind: input, shape index: {}]
  %s4 = inlined_call_operand.vmem [shape: f32[1,10], index: 4, kind: input, shape index: {}]
  %s5 = inlined_call_operand.hbm [shape: f32[2,10], index: 5, kind: output, shape index: {}]
  %s6 = sld [smem:[#allocation0]]
  $region30: #{net_forward.1} parent=0
    _
  %s8 = ssub.s32 1, %s6
  %s9 = scalar_select 0, %s8, %s6
  $region1: #{net_forward.1} parent=0
    #allocation2 [shape = 'u8[1024]{0}', space=vmem, size = 0x400, scoped, tag = 'output window, operand 0, single buffered']
    #allocation3 [shape = 's32[1]{0}', space=sflag, size = 0x4, scoped, tag = 'scoped memory for net_forward.1']
    %10 = vsyncpa [#allocation3], 0
    // Predicated region
    $region2: #{net_forward.1} parent=1 // pred_check
      _
    $region3: #{net_forward.1} parent=1 // pred_check_branch
      %12 = sbr.rel (0) target = $region5
    $region4: #{net_forward.1} parent=1 // pred_region
      _
    $region5: #{net_forward.1} parent=1 // pred_fallthru
      _
    // Predicated region
    $region6: #{net_forward.1} parent=1 // pred_check
      _
    $region7: #{net_forward.1} parent=1 // pred_check_branch
      %14 = sbr.rel (0) target = $region9
    $region8: #{net_forward.1} parent=1 // pred_region
      _
    $region9: #{net_forward.1} parent=1 // pred_fallthru
      _
    // Predicated region
    $region10: #{net_forward.1} parent=1 // pred_check
      _
    $region11: #{net_forward.1} parent=1 // pred_check_branch
      %16 = sbr.rel (0) target = $region13
    $region12: #{net_forward.1} parent=1 // pred_region
      _
    $region13: #{net_forward.1} parent=1 // pred_fallthru
      _
    // Predicated region
    $region14: #{net_forward.1} parent=1 // pred_check
      _
    $region15: #{net_forward.1} parent=1 // pred_check_branch
      %18 = sbr.rel (0) target = $region17
    $region16: #{net_forward.1} parent=1 // pred_region
      _
    $region17: #{net_forward.1} parent=1 // pred_fallthru
      _
    // Predicated region
    $region18: #{net_forward.1} parent=1 // pred_check
      _
    $region19: #{net_forward.1} parent=1 // pred_check_branch
      %20 = sbr.rel (0) target = $region21
    $region20: #{net_forward.1} parent=1 // pred_region
      _
    $region21: #{net_forward.1} parent=1 // pred_fallthru
      _
    %v22 = vld [vmem:[%s0] sm:$0x1]
    %v23 = vld [vmem:[%s1] sm:$0xff]
    %v24 = vld [vmem:[%s1 + $0x8] sm:$0xff]
    %v25 = vld [vmem:[%s1 + $0x10] sm:$0xff]
    %v26 = vld [vmem:[%s1 + $0x18] sm:$0xff]
    %v27 = vld [vmem:[%s1 + $0x20] sm:$0xff]
    %v28 = vld [vmem:[%s1 + $0x28] sm:$0xff]
    %v29 = vld [vmem:[%s1 + $0x30] sm:$0xff]
    %v30 = vld [vmem:[%s1 + $0x38] sm:$0xff]
    %v31 = vld [vmem:[%s2] sm:$0x3]
    %v33 = vlaneseq
    %v34 = vshrl.u32 %v33, 7
    %v35 = vsub.s32 0, %v34
    %v36 = vrot.slane %v31, %v35
    %v37 = vlaneseq
    %v38 = vshrl.u32 %v37, 7
    %v39 = vsub.s32 1, %v38
    %v40 = vrot.slane %v31, %v39
    %v51 = vunpack.c.l.b16 %v23
    %v52 = vunpack.c.h.b16 %v23
    %v53 = vunpack.c.l.b16 %v24
    %v54 = vunpack.c.h.b16 %v24
    %v55 = vunpack.c.l.b16 %v25
    %v56 = vunpack.c.h.b16 %v25
    %v57 = vunpack.c.l.b16 %v26
    %v58 = vunpack.c.h.b16 %v26
    %v59 = vunpack.c.l.b16 %v27
    %v60 = vunpack.c.h.b16 %v27
    %v61 = vunpack.c.l.b16 %v28
    %v62 = vunpack.c.h.b16 %v28
    %v63 = vunpack.c.l.b16 %v29
    %v64 = vunpack.c.h.b16 %v29
    %v65 = vunpack.c.l.b16 %v30
    %v66 = vunpack.c.h.b16 %v30
    %v67 = vpack.c.b16 %v53, %v51
    %v68 = vpack.c.b16 %v54, %v52
    %v69 = vpack.c.b16 %v57, %v55
    %v70 = vpack.c.b16 %v58, %v56
    %v71 = vpack.c.b16 %v61, %v59
    %v72 = vpack.c.b16 %v62, %v60
    %v73 = vpack.c.b16 %v65, %v63
    %v74 = vpack.c.b16 %v66, %v64
    %vm83 = vcmask 523264
    %v85 = vsel %vm83, %v22, 0
    %87 = vmatprep.subr.bf16.mxu0 %v68
    %88 = vmatpush1.bf16.msra.mxu0 %v67
    %89 = vmatprep.subr.bf16.mxu0 %v70
    %90 = vmatpush1.bf16.msra.mxu0 %v69
    %91 = vmatprep.subr.bf16.mxu0 %v72
    %92 = vmatpush1.bf16.msra.mxu0 %v71
    %93 = vmatprep.subr.bf16.mxu0 %v74
    %94 = vmatpush1.bf16.msra.mxu0 %v73
    %95 = vmatprep.subr.bf16.mxu0 0
    %96 = vmatpush1.bf16.msra.mxu0 0
    %97 = vmatprep.subr.bf16.mxu0 0
    %98 = vmatpush1.bf16.msra.mxu0 0
    %99 = vmatprep.subr.bf16.mxu0 0
    %100 = vmatpush1.bf16.msra.mxu0 0
    %101 = vmatprep.subr.bf16.mxu0 0
    %102 = vmatpush1.bf16.msra.mxu0 0
    %103 = vmatprep.subr.bf16.mxu0 0
    %104 = vmatpush1.bf16.msra.mxu0 0
    %105 = vmatprep.subr.bf16.mxu0 0
    %106 = vmatpush1.bf16.msra.mxu0 0
    %107 = vmatprep.subr.bf16.mxu0 0
    %108 = vmatpush1.bf16.msra.mxu0 0
    %109 = vmatprep.subr.bf16.mxu0 0
    %110 = vmatpush1.bf16.msra.mxu0 0
    %111 = vmatprep.subr.bf16.mxu0 0
    %112 = vmatpush1.bf16.msra.mxu0 0
    %113 = vmatprep.subr.bf16.mxu0 0
    %114 = vmatpush1.bf16.msra.mxu0 0
    %115 = vmatprep.subr.bf16.mxu0 0
    %116 = vmatpush1.bf16.msra.mxu0 0
    %117 = vmatprep.subr.bf16.mxu0 0
    %118 = vmatpush1.bf16.msra.mxu0 0
    %119 = vmatprep.mubr.bf16.mxu0 0
    %120 = vmatmul.mubr.bf16.gmra.mrb[0].mxu0 %v85
    %v121 = vpop.f32.mrb[0].mxu0
    %v122 = vadd.f32 %v36, %v121
    %v123 = vpop.f32.mrb[0].mxu0
    %v124 = vadd.f32 %v40, %v123
    %v125 = vpop.f32.mrb[0].mxu0
    %v126 = vpop.f32.mrb[0].mxu0
    %127 = vdwg.mxu0
    %v128 = vmax.f32 %v122, 0.0
    %v129 = vmax.f32 %v124, 0.0
    %v130 = vpack.c.bf16 %v128, %v128
    %v131 = vpack.c.bf16 %v129, %v129
    %v132 = vld [vmem:[%s3] sm:$0xf]
    %v133 = vld [vmem:[%s3 + $0x4] sm:$0xf]
    %v134 = vld [vmem:[%s3 + $0x8] sm:$0xf]
    %v135 = vld [vmem:[%s3 + $0xc] sm:$0xf]
    %v136 = vld [vmem:[%s3 + $0x10] sm:$0xf]
    %v137 = vld [vmem:[%s3 + $0x14] sm:$0xf]
    %v138 = vld [vmem:[%s3 + $0x18] sm:$0xf]
    %v139 = vld [vmem:[%s3 + $0x1c] sm:$0xf]
    %v140 = vld [vmem:[%s3 + $0x20] sm:$0xf]
    %v141 = vld [vmem:[%s3 + $0x24] sm:$0xf]
    %v142 = vld [vmem:[%s3 + $0x28] sm:$0xf]
    %v143 = vld [vmem:[%s3 + $0x2c] sm:$0xf]
    %v144 = vld [vmem:[%s3 + $0x30] sm:$0xf]
    %v145 = vld [vmem:[%s3 + $0x34] sm:$0xf]
    %v146 = vld [vmem:[%s3 + $0x38] sm:$0xf]
    %v147 = vld [vmem:[%s3 + $0x3c] sm:$0xf]
    %v148 = vld [vmem:[%s3 + $0x40] sm:$0xf]
    %v149 = vld [vmem:[%s3 + $0x44] sm:$0xf]
    %v150 = vld [vmem:[%s3 + $0x48] sm:$0xf]
    %v151 = vld [vmem:[%s3 + $0x4c] sm:$0xf]
    %v152 = vld [vmem:[%s3 + $0x50] sm:$0xf]
    %v153 = vld [vmem:[%s3 + $0x54] sm:$0xf]
    %v154 = vld [vmem:[%s3 + $0x58] sm:$0xf]
    %v155 = vld [vmem:[%s3 + $0x5c] sm:$0xf]
    %v156 = vld [vmem:[%s3 + $0x60] sm:$0xf]
    %v157 = vld [vmem:[%s3 + $0x64] sm:$0xf]
    %v158 = vld [vmem:[%s3 + $0x68] sm:$0xf]
    %v159 = vld [vmem:[%s3 + $0x6c] sm:$0xf]
    %v160 = vld [vmem:[%s3 + $0x70] sm:$0xf]
    %v161 = vld [vmem:[%s3 + $0x74] sm:$0xf]
    %v162 = vld [vmem:[%s3 + $0x78] sm:$0xf]
    %v163 = vld [vmem:[%s3 + $0x7c] sm:$0xf]
    %v164 = vld [vmem:[%s4] sm:$0x1]
    %v166 = vlaneseq
    %v167 = vshrl.u32 %v166, 7
    %v168 = vsub.s32 0, %v167
    %v169 = vrot.slane %v164, %v168
    %v203 = vunpack.c.l.b16 %v132
    %v204 = vunpack.c.l.b16 %v133
    %v205 = vunpack.c.l.b16 %v134
    %v206 = vunpack.c.l.b16 %v135
    %v207 = vunpack.c.l.b16 %v136
    %v208 = vunpack.c.l.b16 %v137
    %v209 = vunpack.c.l.b16 %v138
    %v210 = vunpack.c.l.b16 %v139
    %v211 = vunpack.c.l.b16 %v140
    %v212 = vunpack.c.l.b16 %v141
    %v213 = vunpack.c.l.b16 %v142
    %v214 = vunpack.c.l.b16 %v143
    %v215 = vunpack.c.l.b16 %v144
    %v216 = vunpack.c.l.b16 %v145
    %v217 = vunpack.c.l.b16 %v146
    %v218 = vunpack.c.l.b16 %v147
    %v219 = vunpack.c.l.b16 %v148
    %v220 = vunpack.c.l.b16 %v149
    %v221 = vunpack.c.l.b16 %v150
    %v222 = vunpack.c.l.b16 %v151
    %v223 = vunpack.c.l.b16 %v152
    %v224 = vunpack.c.l.b16 %v153
    %v225 = vunpack.c.l.b16 %v154
    %v226 = vunpack.c.l.b16 %v155
    %v227 = vunpack.c.l.b16 %v156
    %v228 = vunpack.c.l.b16 %v157
    %v229 = vunpack.c.l.b16 %v158
    %v230 = vunpack.c.l.b16 %v159
    %v231 = vunpack.c.l.b16 %v160
    %v232 = vunpack.c.l.b16 %v161
    %v233 = vunpack.c.l.b16 %v162
    %v234 = vunpack.c.l.b16 %v163
    %v235 = vpack.c.b16 %v204, %v203
    %v236 = vpack.c.b16 %v206, %v205
    %v237 = vpack.c.b16 %v208, %v207
    %v238 = vpack.c.b16 %v210, %v209
    %v239 = vpack.c.b16 %v212, %v211
    %v240 = vpack.c.b16 %v214, %v213
    %v241 = vpack.c.b16 %v216, %v215
    %v242 = vpack.c.b16 %v218, %v217
    %v243 = vpack.c.b16 %v220, %v219
    %v244 = vpack.c.b16 %v222, %v221
    %v245 = vpack.c.b16 %v224, %v223
    %v246 = vpack.c.b16 %v226, %v225
    %v247 = vpack.c.b16 %v228, %v227
    %v248 = vpack.c.b16 %v230, %v229
    %v249 = vpack.c.b16 %v232, %v231
    %v250 = vpack.c.b16 %v234, %v233
    %267 = vmatprep.subr.bf16.mxu0 0
    %268 = vmatpush1.bf16.msra.mxu0 %v235
    %269 = vmatprep.subr.bf16.mxu0 0
    %270 = vmatpush1.bf16.msra.mxu0 %v236
    %271 = vmatprep.subr.bf16.mxu0 0
    %272 = vmatpush1.bf16.msra.mxu0 %v237
    %273 = vmatprep.subr.bf16.mxu0 0
    %274 = vmatpush1.bf16.msra.mxu0 %v238
    %275 = vmatprep.subr.bf16.mxu0 0
    %276 = vmatpush1.bf16.msra.mxu0 %v239
    %277 = vmatprep.subr.bf16.mxu0 0
    %278 = vmatpush1.bf16.msra.mxu0 %v240
    %279 = vmatprep.subr.bf16.mxu0 0
    %280 = vmatpush1.bf16.msra.mxu0 %v241
    %281 = vmatprep.subr.bf16.mxu0 0
    %282 = vmatpush1.bf16.msra.mxu0 %v242
    %283 = vmatprep.subr.bf16.mxu0 0
    %284 = vmatpush1.bf16.msra.mxu0 %v243
    %285 = vmatprep.subr.bf16.mxu0 0
    %286 = vmatpush1.bf16.msra.mxu0 %v244
    %287 = vmatprep.subr.bf16.mxu0 0
    %288 = vmatpush1.bf16.msra.mxu0 %v245
    %289 = vmatprep.subr.bf16.mxu0 0
    %290 = vmatpush1.bf16.msra.mxu0 %v246
    %291 = vmatprep.subr.bf16.mxu0 0
    %292 = vmatpush1.bf16.msra.mxu0 %v247
    %293 = vmatprep.subr.bf16.mxu0 0
    %294 = vmatpush1.bf16.msra.mxu0 %v248
    %295 = vmatprep.subr.bf16.mxu0 0
    %296 = vmatpush1.bf16.msra.mxu0 %v249
    %297 = vmatprep.subr.bf16.mxu0 0
    %298 = vmatpush1.bf16.msra.mxu0 %v250
    %299 = vmatprep.mubr.bf16.mxu0 %v131
    %300 = vmatmul.mubr.bf16.gmra.mrb[0].mxu0 %v130
    %v301 = vpop.f32.mrb[0].mxu0
    %v302 = vadd.f32 %v169, %v301
    %v303 = vpop.f32.mrb[0].mxu0
    %v304 = vpop.f32.mrb[0].mxu0
    %v305 = vpop.f32.mrb[0].mxu0
    %306 = vdwg.mxu0
    %vm307 = vcmask 74752
    %308 = vst.msk [vmem:[#allocation2] sm:$0x3] %vm307, %v302
    // Predicated region
    $region22: #{net_forward.1} parent=1 // pred_check
      _
    $region23: #{net_forward.1} parent=1 // pred_check_branch
      %310 = sbr.rel (0) target = $region25
    $region24: #{net_forward.1} parent=1 // pred_region
      %s312 = ssub.s32 32, 32
      %313 = vsyncadd [#allocation3], %s312
      %s315 = sshll.u32 [#allocation2], 4
      %s316 = int_to_ptr.vmem [resolvable:$true] %s315
      %318 = dma.vmem_to_hbm [thread:$0]  %s316, 32, %s5, [#allocation3]
    $region25: #{net_forward.1} parent=1 // pred_fallthru
      _
    // Predicated region
    $region26: #{net_forward.1} parent=1 // pred_check
      _
    $region27: #{net_forward.1} parent=1 // pred_check_branch
      %320 = sbr.rel (0) target = $region29
    $region28: #{net_forward.1} parent=1 // pred_region
      %321 = dma.done [#allocation3], 32
    $region29: #{net_forward.1} parent=1 // pred_fallthru
      _
    %322 = vsyncpa [#allocation3], 1

</llo_original>
